<compile_context>
chip_gen: v5e
topology: v5e:2x2
jax: 0.10.0
libtpu: 0.0.40
codegen_flags: <defaults>
</compile_context>

<pallas_src>
import jax
import jax.numpy as jnp
from jax.experimental import pallas as pl
from jax.experimental.pallas import tpu as pltpu


def polarnet_kernel(x_ref, p_ref, out_ref):
    # x_ref:   (2, TILE)    cartesian inputs, batch on the lane axis
    # p_ref:   (H_pad, 8)   packed params: col0=W1[0,:], col1=W1[1,:], col2=b1,
    #                       col3=W2[:,0], col4 row0 = b2. Padded H rows are all
    #                       zero, so they contribute tanh(0)*0 = 0 to the logit.
    # out_ref: (1, TILE)
    x = x_ref[...]
    x0 = x[0:1, :]                               # (1, TILE) sublane slice
    x1 = x[1:2, :]                               # (1, TILE)

    # Polar transform (VPU + EUP). Padded tail lanes are zero: atan2(0,0)=0 and
    # sqrt(0)=0, so no NaN/Inf is produced in the (discarded) padding.
    r = jnp.sqrt(x0 * x0 + x1 * x1)              # (1, TILE)
    a = jnp.arctan2(x1, x0)                      # (1, TILE)

    p = p_ref[...]                               # (H_pad, 8) -- tiny, lives in vregs
    h_pad = p.shape[0]
    b2 = p[0:1, 4:5]                             # (1, 1)

    # Hidden layer + output reduction, chunked over 8-sublane slabs so only a
    # few (8, TILE) values are live at a time (no (H, TILE) spill traffic).
    # Each chunk: two VPU FMAs + bias, tanh on EUP, multiply + XLU sublane reduce.
    acc = jnp.zeros_like(r)                      # (1, TILE) f32 accumulator
    for c in range(h_pad // 8):
        lo, hi = c * 8, (c + 1) * 8
        w1r_c = p[lo:hi, 0:1]                    # (8, 1)
        w1a_c = p[lo:hi, 1:2]                    # (8, 1)
        b1_c = p[lo:hi, 2:3]                     # (8, 1)
        w2_c = p[lo:hi, 3:4]                     # (8, 1)
        hid_c = jnp.tanh(w1r_c * r + w1a_c * a + b1_c)             # (8, TILE)
        acc = acc + jnp.sum(hid_c * w2_c, axis=0, keepdims=True)   # (1, TILE)

    out_ref[...] = jax.nn.sigmoid(acc + b2)


def polarnet_forward(x, w1, b1, w2, b2, *, tile=None):
    """x: (N, 2); w1: (2, H); b1: (1, H) or (H,); w2: (H, 1) or (H,); b2: (1,1) or scalar."""
    n = x.shape[0]
    h = w1.shape[1]
    h_pad = ((h + 7) // 8) * 8

    if tile is None:
        # Lane tile amortizes the ~0.35 us per-grid-step pipeline overhead for
        # large N while staying lane-dense (power of two >= 512, multiple of 128).
        # At tile=8192 the per-step footprint (double-buffered in/out + chunked
        # intermediates) is well under 1 MiB on all generations.
        tile = min(8192, max(512, pl.next_power_of_2(n)))
    n_pad = max(tile, pl.cdiv(n, tile) * tile)

    # Layout plumbing in the wrapper (not in-kernel): batch on lanes, pad to tile.
    # Zero-padding the batch tail is load-bearing: atan2(0,0)=0 keeps the padded
    # lanes NaN-free (they are sliced away below).
    xt = jnp.pad(x.astype(jnp.float32).T, ((0, 0), (0, n_pad - n)))   # (2, n_pad)

    # Pack all parameters into one (h_pad, 8) f32 array: one ref, one DMA
    # descriptor, one double-buffer instead of five.
    w1f = jnp.asarray(w1, jnp.float32).reshape(2, h)
    params = jnp.zeros((h_pad, 8), jnp.float32)
    params = params.at[:h, 0].set(w1f[0])
    params = params.at[:h, 1].set(w1f[1])
    params = params.at[:h, 2].set(jnp.reshape(b1, (h,)).astype(jnp.float32))
    params = params.at[:h, 3].set(jnp.reshape(w2, (h,)).astype(jnp.float32))
    params = params.at[0, 4].set(jnp.reshape(b2, ()).astype(jnp.float32))

    grid = (n_pad // tile,)
    out_t = pl.pallas_call(
        polarnet_kernel,
        out_shape=jax.ShapeDtypeStruct((1, n_pad), jnp.float32),
        grid_spec=pltpu.PrefetchScalarGridSpec(
            num_scalar_prefetch=0,
            grid=grid,
            in_specs=[
                pl.BlockSpec((2, tile), lambda i: (0, i)),       # x tile
                pl.BlockSpec((h_pad, 8), lambda i: (0, 0)),      # packed params
            ],
            out_specs=pl.BlockSpec((1, tile), lambda i: (0, i)),
        ),
        compiler_params=pltpu.CompilerParams(
            # NOTE: on v7x, pltpu.CORE_PARALLEL on this axis shards grid steps
            # across the 2 TensorCores; "parallel" kept here for portability
            # across v5e/v6e/v7x (single pallas_call, no core_map mesh).
            dimension_semantics=("parallel",),
        ),
        cost_estimate=pl.CostEstimate(
            flops=int(n_pad * (6 * h + 6)),
            transcendentals=int(n_pad * (h + 3)),
            bytes_accessed=int(12 * n_pad + 32 * h_pad),
        ),
    )(xt, params)

    return out_t[0, :n].reshape(n, 1)


def polarnet_reference(x, w1, b1, w2, b2):
    """Plain-JAX reference with the original (N, features) layout."""
    r = jnp.sqrt(x[:, 0] ** 2 + x[:, 1] ** 2)
    a = jnp.arctan2(x[:, 1], x[:, 0])
    polar = jnp.stack((r, a), axis=1)
    hid1 = jnp.tanh(polar @ w1 + jnp.reshape(b1, (1, -1)))
    return jax.nn.sigmoid(hid1 @ jnp.reshape(w2, (-1, 1)) + jnp.reshape(b2, (1, 1)))


def init_params(key, num_hid):
    """Deterministic init mimicking PyTorch nn.Linear defaults:
    U(-1/sqrt(fan_in), 1/sqrt(fan_in)) for both weight and bias."""
    k1, k2, k3, k4 = jax.random.split(key, 4)
    bound1 = 1.0 / jnp.sqrt(2.0)             # fc: in_features=2
    bound2 = 1.0 / jnp.sqrt(float(num_hid))  # output: in_features=num_hid
    w1 = jax.random.uniform(k1, (2, num_hid), jnp.float32, -bound1, bound1)
    b1 = jax.random.uniform(k2, (1, num_hid), jnp.float32, -bound1, bound1)
    w2 = jax.random.uniform(k3, (num_hid, 1), jnp.float32, -bound2, bound2)
    b2 = jax.random.uniform(k4, (1, 1), jnp.float32, -bound2, bound2)
    return w1, b1, w2, b2


if __name__ == "__main__":
    num_hid = 32
    batch = 8

    key = jax.random.PRNGKey(0)
    kx, kp, kx2 = jax.random.split(key, 3)
    w1, b1, w2, b2 = init_params(kp, num_hid)

    # Small-shape check (grid = 1 step, tile auto-sized to 512).
    x = jax.random.normal(kx, (batch, 2), jnp.float32)
    out = jax.jit(polarnet_forward)(x, w1, b1, w2, b2)
    out = jax.block_until_ready(out)
    ref = polarnet_reference(x, w1, b1, w2, b2)
    assert out.shape == (batch, 1)
    assert jnp.allclose(out, ref, atol=1e-5, rtol=1e-5)

    # Multi-step-grid / ragged-padding check (tile forced small so grid > 1).
    n2 = 1111
    x2 = jax.random.normal(kx2, (n2, 2), jnp.float32)
    out2 = jax.jit(lambda *args: polarnet_forward(*args, tile=512))(x2, w1, b1, w2, b2)
    out2 = jax.block_until_ready(out2)
    ref2 = polarnet_reference(x2, w1, b1, w2, b2)
    assert out2.shape == (n2, 1)
    assert jnp.allclose(out2, ref2, atol=1e-5, rtol=1e-5)

    print("KERNEL_OK")
</pallas_src>

<mosaic_0001>
module attributes {stable_mosaic.version = 11 : i64} {
  func.func @polarnet_kernel(%arg0: i32, %arg1: memref<2x512xf32, #tpu.memory_space<vmem>>, %arg2: memref<32x8xf32, #tpu.memory_space<vmem>>, %arg3: memref<1x512xf32, #tpu.memory_space<vmem>>) attributes {dimension_semantics = [#tpu.dimension_semantics<parallel>], iteration_bounds = array<i64: 1>, scalar_prefetch = 0 : i64, scratch_operands = 0 : i64, tpu.core_type = #tpu.core_type<tc>, window_params = [{transform_indices = @transform_0, window_bounds = array<i64: 2, 512>}, {pipeline_mode = #tpu.pipeline_mode<synchronous>, transform_indices = @transform_1, window_bounds = array<i64: 32, 8>}, {transform_indices = @transform_2, window_bounds = array<i64: 1, 512>}]} {
    %c0 = arith.constant 0 : index
    %c0_0 = arith.constant 0 : index
    %0 = vector.load %arg1[%c0, %c0_0] : memref<2x512xf32, #tpu.memory_space<vmem>>, vector<2x512xf32>
    %1 = vector.extract_strided_slice %0 {offsets = [0, 0], sizes = [1, 512], strides = [1, 1]} : vector<2x512xf32> to vector<1x512xf32>
    %2 = vector.extract_strided_slice %0 {offsets = [1, 0], sizes = [1, 512], strides = [1, 1]} : vector<2x512xf32> to vector<1x512xf32>
    %3 = arith.mulf %1, %1 : vector<1x512xf32>
    %4 = arith.mulf %2, %2 : vector<1x512xf32>
    %5 = arith.addf %3, %4 : vector<1x512xf32>
    %6 = math.sqrt %5 : vector<1x512xf32>
    %7 = math.atan2 %2, %1 : vector<1x512xf32>
    %c0_1 = arith.constant 0 : index
    %c0_2 = arith.constant 0 : index
    %8 = vector.load %arg2[%c0_1, %c0_2] : memref<32x8xf32, #tpu.memory_space<vmem>>, vector<32x8xf32>
    %9 = vector.extract_strided_slice %8 {offsets = [0, 4], sizes = [1, 1], strides = [1, 1]} : vector<32x8xf32> to vector<1x1xf32>
    %cst = arith.constant 0.000000e+00 : f32
    %10 = vector.broadcast %cst : f32 to vector<1x512xf32>
    %11 = vector.extract_strided_slice %8 {offsets = [0, 0], sizes = [8, 1], strides = [1, 1]} : vector<32x8xf32> to vector<8x1xf32>
    %12 = vector.extract_strided_slice %8 {offsets = [0, 1], sizes = [8, 1], strides = [1, 1]} : vector<32x8xf32> to vector<8x1xf32>
    %13 = vector.extract_strided_slice %8 {offsets = [0, 2], sizes = [8, 1], strides = [1, 1]} : vector<32x8xf32> to vector<8x1xf32>
    %14 = vector.extract_strided_slice %8 {offsets = [0, 3], sizes = [8, 1], strides = [1, 1]} : vector<32x8xf32> to vector<8x1xf32>
    %15 = vector.broadcast %11 : vector<8x1xf32> to vector<8x512xf32>
    %16 = vector.broadcast %6 : vector<1x512xf32> to vector<8x512xf32>
    %17 = arith.mulf %15, %16 : vector<8x512xf32>
    %18 = vector.broadcast %12 : vector<8x1xf32> to vector<8x512xf32>
    %19 = vector.broadcast %7 : vector<1x512xf32> to vector<8x512xf32>
    %20 = arith.mulf %18, %19 : vector<8x512xf32>
    %21 = arith.addf %17, %20 : vector<8x512xf32>
    %22 = vector.broadcast %13 : vector<8x1xf32> to vector<8x512xf32>
    %23 = arith.addf %21, %22 : vector<8x512xf32>
    %24 = math.tanh %23 : vector<8x512xf32>
    %25 = vector.broadcast %14 : vector<8x1xf32> to vector<8x512xf32>
    %26 = arith.mulf %24, %25 : vector<8x512xf32>
    %cst_3 = arith.constant dense<0.000000e+00> : vector<512xf32>
    %27 = vector.multi_reduction <add>, %26, %cst_3 [0] : vector<8x512xf32> to vector<512xf32>
    %28 = vector.shape_cast %27 : vector<512xf32> to vector<1x512xf32>
    %29 = arith.addf %10, %28 : vector<1x512xf32>
    %30 = vector.extract_strided_slice %8 {offsets = [8, 0], sizes = [8, 1], strides = [1, 1]} : vector<32x8xf32> to vector<8x1xf32>
    %31 = vector.extract_strided_slice %8 {offsets = [8, 1], sizes = [8, 1], strides = [1, 1]} : vector<32x8xf32> to vector<8x1xf32>
    %32 = vector.extract_strided_slice %8 {offsets = [8, 2], sizes = [8, 1], strides = [1, 1]} : vector<32x8xf32> to vector<8x1xf32>
    %33 = vector.extract_strided_slice %8 {offsets = [8, 3], sizes = [8, 1], strides = [1, 1]} : vector<32x8xf32> to vector<8x1xf32>
    %34 = vector.broadcast %30 : vector<8x1xf32> to vector<8x512xf32>
    %35 = vector.broadcast %6 : vector<1x512xf32> to vector<8x512xf32>
    %36 = arith.mulf %34, %35 : vector<8x512xf32>
    %37 = vector.broadcast %31 : vector<8x1xf32> to vector<8x512xf32>
    %38 = vector.broadcast %7 : vector<1x512xf32> to vector<8x512xf32>
    %39 = arith.mulf %37, %38 : vector<8x512xf32>
    %40 = arith.addf %36, %39 : vector<8x512xf32>
    %41 = vector.broadcast %32 : vector<8x1xf32> to vector<8x512xf32>
    %42 = arith.addf %40, %41 : vector<8x512xf32>
    %43 = math.tanh %42 : vector<8x512xf32>
    %44 = vector.broadcast %33 : vector<8x1xf32> to vector<8x512xf32>
    %45 = arith.mulf %43, %44 : vector<8x512xf32>
    %cst_4 = arith.constant dense<0.000000e+00> : vector<512xf32>
    %46 = vector.multi_reduction <add>, %45, %cst_4 [0] : vector<8x512xf32> to vector<512xf32>
    %47 = vector.shape_cast %46 : vector<512xf32> to vector<1x512xf32>
    %48 = arith.addf %29, %47 : vector<1x512xf32>
    %49 = vector.extract_strided_slice %8 {offsets = [16, 0], sizes = [8, 1], strides = [1, 1]} : vector<32x8xf32> to vector<8x1xf32>
    %50 = vector.extract_strided_slice %8 {offsets = [16, 1], sizes = [8, 1], strides = [1, 1]} : vector<32x8xf32> to vector<8x1xf32>
    %51 = vector.extract_strided_slice %8 {offsets = [16, 2], sizes = [8, 1], strides = [1, 1]} : vector<32x8xf32> to vector<8x1xf32>
    %52 = vector.extract_strided_slice %8 {offsets = [16, 3], sizes = [8, 1], strides = [1, 1]} : vector<32x8xf32> to vector<8x1xf32>
    %53 = vector.broadcast %49 : vector<8x1xf32> to vector<8x512xf32>
    %54 = vector.broadcast %6 : vector<1x512xf32> to vector<8x512xf32>
    %55 = arith.mulf %53, %54 : vector<8x512xf32>
    %56 = vector.broadcast %50 : vector<8x1xf32> to vector<8x512xf32>
    %57 = vector.broadcast %7 : vector<1x512xf32> to vector<8x512xf32>
    %58 = arith.mulf %56, %57 : vector<8x512xf32>
    %59 = arith.addf %55, %58 : vector<8x512xf32>
    %60 = vector.broadcast %51 : vector<8x1xf32> to vector<8x512xf32>
    %61 = arith.addf %59, %60 : vector<8x512xf32>
    %62 = math.tanh %61 : vector<8x512xf32>
    %63 = vector.broadcast %52 : vector<8x1xf32> to vector<8x512xf32>
    %64 = arith.mulf %62, %63 : vector<8x512xf32>
    %cst_5 = arith.constant dense<0.000000e+00> : vector<512xf32>
    %65 = vector.multi_reduction <add>, %64, %cst_5 [0] : vector<8x512xf32> to vector<512xf32>
    %66 = vector.shape_cast %65 : vector<512xf32> to vector<1x512xf32>
    %67 = arith.addf %48, %66 : vector<1x512xf32>
    %68 = vector.extract_strided_slice %8 {offsets = [24, 0], sizes = [8, 1], strides = [1, 1]} : vector<32x8xf32> to vector<8x1xf32>
    %69 = vector.extract_strided_slice %8 {offsets = [24, 1], sizes = [8, 1], strides = [1, 1]} : vector<32x8xf32> to vector<8x1xf32>
    %70 = vector.extract_strided_slice %8 {offsets = [24, 2], sizes = [8, 1], strides = [1, 1]} : vector<32x8xf32> to vector<8x1xf32>
    %71 = vector.extract_strided_slice %8 {offsets = [24, 3], sizes = [8, 1], strides = [1, 1]} : vector<32x8xf32> to vector<8x1xf32>
    %72 = vector.broadcast %68 : vector<8x1xf32> to vector<8x512xf32>
    %73 = vector.broadcast %6 : vector<1x512xf32> to vector<8x512xf32>
    %74 = arith.mulf %72, %73 : vector<8x512xf32>
    %75 = vector.broadcast %69 : vector<8x1xf32> to vector<8x512xf32>
    %76 = vector.broadcast %7 : vector<1x512xf32> to vector<8x512xf32>
    %77 = arith.mulf %75, %76 : vector<8x512xf32>
    %78 = arith.addf %74, %77 : vector<8x512xf32>
    %79 = vector.broadcast %70 : vector<8x1xf32> to vector<8x512xf32>
    %80 = arith.addf %78, %79 : vector<8x512xf32>
    %81 = math.tanh %80 : vector<8x512xf32>
    %82 = vector.broadcast %71 : vector<8x1xf32> to vector<8x512xf32>
    %83 = arith.mulf %81, %82 : vector<8x512xf32>
    %cst_6 = arith.constant dense<0.000000e+00> : vector<512xf32>
    %84 = vector.multi_reduction <add>, %83, %cst_6 [0] : vector<8x512xf32> to vector<512xf32>
    %85 = vector.shape_cast %84 : vector<512xf32> to vector<1x512xf32>
    %86 = arith.addf %67, %85 : vector<1x512xf32>
    %87 = vector.broadcast %9 : vector<1x1xf32> to vector<1x512xf32>
    %88 = arith.addf %86, %87 : vector<1x512xf32>
    %89 = arith.negf %88 : vector<1x512xf32>
    %90 = math.exp %89 : vector<1x512xf32>
    %cst_7 = arith.constant 1.000000e+00 : f32
    %91 = vector.broadcast %cst_7 : f32 to vector<1x512xf32>
    %92 = arith.addf %91, %90 : vector<1x512xf32>
    %93 = arith.divf %91, %92 : vector<1x512xf32>
    %c0_8 = arith.constant 0 : index
    %c0_9 = arith.constant 0 : index
    %94 = vector.load %arg3[%c0_8, %c0_9] : memref<1x512xf32, #tpu.memory_space<vmem>>, vector<1x512xf32>
    tpu.vector_store %arg3[%c0_8, %c0_9], %93 {strides = array<i32>} : memref<1x512xf32, #tpu.memory_space<vmem>>, vector<1x512xf32>,
    return
  }
  func.func @transform_0(%arg0: i32) -> (i32, i32) {
    %c0_i32 = arith.constant 0 : i32
    %c0_i32_0 = arith.constant 0 : i32
    return %c0_i32, %arg0 : i32, i32
  }
  func.func @transform_1(%arg0: i32) -> (i32, i32) {
    %c0_i32 = arith.constant 0 : i32
    %c0_i32_0 = arith.constant 0 : i32
    %c0_i32_1 = arith.constant 0 : i32
    return %c0_i32, %c0_i32_0 : i32, i32
  }
  func.func @transform_2(%arg0: i32) -> (i32, i32) {
    %c0_i32 = arith.constant 0 : i32
    %c0_i32_0 = arith.constant 0 : i32
    return %c0_i32, %arg0 : i32, i32
  }
}

</mosaic_0001>

<llo_original>
// kernel: polarnet_forward.1
$region0: #{polarnet_forward.1}
  #allocation0 [shape = 'u32[]', space=smem, size = 0x4, offset = 0x4, fixed_abs, tag = 'smem constant byte address 0x4 - core index']
  #allocation1 [shape = 'u32[72,128]{1,0:T(1,128)}', space=vmem, size = 0x9000, scoped, tag = 'internal scratch']
  %s0 = inlined_call_operand.vmem [shape: f32[2,512], index: 0, kind: input, shape index: {}]
  %s1 = inlined_call_operand.vmem [shape: f32[32,8], index: 1, kind: input, shape index: {}]
  %s2 = inlined_call_operand.vmem [shape: f32[1,512], index: 2, kind: output, shape index: {}]
  %s3 = sld [smem:[#allocation0]]
  $region18: #{polarnet_forward.1} parent=0
    _
  %s5 = ssub.s32 1, %s3
  %s6 = scalar_select 0, %s5, %s3
  // Predicated region
  $region2: #{polarnet_forward.1} parent=0 // pred_check
    _
  $region3: #{polarnet_forward.1} parent=0 // pred_check_branch
    %8 = sbr.rel (0) target = $region5
  $region4: #{polarnet_forward.1} parent=0 // pred_region
    _
  $region5: #{polarnet_forward.1} parent=0 // pred_fallthru
    _
  // Predicated region
  $region6: #{polarnet_forward.1} parent=0 // pred_check
    _
  $region7: #{polarnet_forward.1} parent=0 // pred_check_branch
    %10 = sbr.rel (0) target = $region9
  $region8: #{polarnet_forward.1} parent=0 // pred_region
    _
  $region9: #{polarnet_forward.1} parent=0 // pred_fallthru
    _
  %v11 = vld [vmem:[%s0] sm:$0xff]
  %v12 = vmul.f32 %v11, %v11
  %v14 = vrot.slane %v12, 7
  %v15 = vrot.slane %v14, 2
  %v17 = vadd.f32 %v12, %v15
  %v18 = vrsqrt.pop %v17
  %v19 = vmul.f32 %v18, %v17
  %v20 = vmul.f32 %v19, %v18
  %v21 = vmul.f32 0.5, %v20
  %v22 = vsub.f32 1.5, %v21
  %v23 = vmul.f32 %v18, %v22
  %v24 = vmul.f32 %v17, %v23
  %vm25 = vcmp.eq.f32.partialorder %v17, inf
  %v26 = vsel %vm25, %v17, %v24
  %vm27 = vcmp.eq.f32.partialorder %v17, 0.0
  %v28 = vand.u32 %v17, 2147483648
  %v29 = vsel %vm27, %v28, %v26
  %v31 = vrot.slane %v11, 7
  %v33 = vand.u32 2147483647, %v31
  %v34 = vand.u32 2147483647, %v11
  %v35 = vmin.f32 %v33, %v34
  %v36 = vmax.f32 %v33, %v34
  %v37 = vrcp.pop %v36
  %v38 = vmul.f32 %v36, %v37
  %v39 = vsub.f32 1.0, %v38
  %v40 = vmul.f32 %v37, %v39
  %v41 = vadd.f32 %v37, %v40
  %vm42 = vweird.f32 %v36
  %vm43 = vweird.f32 %v37
  %vm44 = vmor %vm42, %vm43
  %v45 = vsel %vm44, %v37, %v41
  %v46 = vand.u32 2147483647, %v36
  %vm47 = vcmp.eq.f32.partialorder %v46, 8.507059e+37
  %v48 = vand.u32 %v36, 2147483648
  %v49 = vor.u32 1.1754944e-38, %v48
  %v50 = vsel %vm47, %v49, %v45
  %v51 = vmul.f32 %v35, %v50
  %v52 = vmul.f32 %v51, %v51
  %v53 = vmul.f32 0.002785687, %v52
  %v54 = vadd.f32 %v53, -0.015866
  %v55 = vmul.f32 %v54, %v52
  %v56 = vadd.f32 %v55, 0.04247222
  %v57 = vmul.f32 %v56, %v52
  %v58 = vadd.f32 %v57, -0.074975304
  %v59 = vmul.f32 %v58, %v52
  %v60 = vadd.f32 %v59, 0.1064488
  %v61 = vmul.f32 %v60, %v52
  %v62 = vadd.f32 %v61, -0.14207031
  %v63 = vmul.f32 %v62, %v52
  %v64 = vadd.f32 %v63, 0.19993454
  %v65 = vmul.f32 %v64, %v52
  %v66 = vadd.f32 %v65, -0.33333147
  %v67 = vmul.f32 %v66, %v52
  %v68 = vmul.f32 %v67, %v51
  %v69 = vadd.f32 %v68, %v51
  %vm70 = vcmp.gt.f32.partialorder %v34, %v33
  %v71 = vsub.f32 1.5707964, %v69
  %v72 = vsel %vm70, %v71, %v69
  %vm73 = vcmp.lt.f32.partialorder %v31, 0.0
  %v74 = vsub.f32 3.1415927, %v72
  %v75 = vsel %vm73, %v74, %v72
  %vm76 = vcmp.lt.s32.totalorder %v31, 0
  %v77 = vsel %vm76, 3.1415927, 0.0
  %vm78 = vcmp.eq.f32.partialorder %v11, 0.0
  %v79 = vsel %vm78, %v77, %v75
  %vm80 = vcmp.ne.f32.partialorder %v31, %v31
  %vm81 = vcmp.ne.f32.partialorder %v11, %v11
  %vm82 = vmor %vm80, %vm81
  %v83 = vsel %vm82, nan, %v79
  %vm84 = vcmp.lt.f32.partialorder %v31, 0.0
  %v85 = vsel %vm84, 2.3561945, 0.7853982
  %vm86 = vcmp.eq.s32.totalorder %v33, inf
  %vm87 = vcmp.eq.s32.totalorder %v34, inf
  %vm88 = vmand %vm86, %vm87
  %v89 = vsel %vm88, %v85, %v83
  %v90 = vand.u32 2147483647, %v89
  %v91 = vand.u32 %v11, 2147483648
  %v92 = vor.u32 %v90, %v91
  %v93 = vld [vmem:[%s1] sm:$0xff]
  %v94 = vld [vmem:[%s1 + $0x8] sm:$0xff]
  %v95 = vld [vmem:[%s1 + $0x10] sm:$0xff]
  %v96 = vld [vmem:[%s1 + $0x18] sm:$0xff]
  %98 = vset.pattern.permute.xlu0 0
  %99 = vperm.xlu0 %98, %v93
  %v100 = vpop.permute.xlu0 %99
  %v103 = vperm.slane %v29, 0
  %v104 = vperm.slane %v29, 2
  %v105 = vperm.slane %v29, 4
  %v106 = vperm.slane %v29, 6
  %v111 = vperm.slane %v103, 0
  %v112 = vperm.slane %v104, 0
  %v113 = vperm.slane %v105, 0
  %v114 = vperm.slane %v106, 0
  %v115 = vmul.f32 %v100, %v111
  %v116 = vmul.f32 %v100, %v112
  %v117 = vmul.f32 %v100, %v113
  %v118 = vmul.f32 %v100, %v114
  %119 = vset.pattern.permute.xlu0 1
  %120 = vperm.xlu0 %119, %v93
  %v121 = vpop.permute.xlu0 %120
  %v124 = vperm.slane %v92, 1
  %v125 = vperm.slane %v92, 3
  %v126 = vperm.slane %v92, 5
  %v127 = vperm.slane %v92, 7
  %v132 = vperm.slane %v124, 1
  %v133 = vperm.slane %v125, 1
  %v134 = vperm.slane %v126, 1
  %v135 = vperm.slane %v127, 1
  %v136 = vmul.f32 %v121, %v132
  %v137 = vmul.f32 %v121, %v133
  %v138 = vmul.f32 %v121, %v134
  %v139 = vmul.f32 %v121, %v135
  %v140 = vadd.f32 %v115, %v136
  %v141 = vadd.f32 %v116, %v137
  %v142 = vadd.f32 %v117, %v138
  %v143 = vadd.f32 %v118, %v139
  %144 = vset.pattern.permute.xlu0 2
  %145 = vperm.xlu0 %144, %v93
  %v146 = vpop.permute.xlu0 %145
  %v148 = vadd.f32 %v140, %v146
  %v149 = vadd.f32 %v141, %v146
  %v150 = vadd.f32 %v142, %v146
  %v151 = vadd.f32 %v143, %v146
  %v152 = vtanh.pop %v148
  %v153 = vtanh.pop %v149
  %v154 = vtanh.pop %v150
  %v155 = vtanh.pop %v151
  %156 = vset.pattern.permute.xlu0 3
  %157 = vperm.xlu0 %156, %v93
  %v158 = vpop.permute.xlu0 %157
  %v160 = vmul.f32 %v152, %v158
  %v161 = vmul.f32 %v153, %v158
  %v162 = vmul.f32 %v154, %v158
  %v163 = vmul.f32 %v155, %v158
  %v164 = vrot.slane %v160, 4
  %v165 = vadd.f32 %v160, %v164
  %v166 = vrot.slane %v165, 2
  %v167 = vadd.f32 %v165, %v166
  %v168 = vrot.slane %v167, 1
  %v169 = vadd.f32 %v167, %v168
  %v170 = vrot.slane %v161, 4
  %v171 = vadd.f32 %v161, %v170
  %v172 = vrot.slane %v171, 2
  %v173 = vadd.f32 %v171, %v172
  %v174 = vrot.slane %v173, 1
  %v175 = vadd.f32 %v173, %v174
  %v176 = vrot.slane %v162, 4
  %v177 = vadd.f32 %v162, %v176
  %v178 = vrot.slane %v177, 2
  %v179 = vadd.f32 %v177, %v178
  %v180 = vrot.slane %v179, 1
  %v181 = vadd.f32 %v179, %v180
  %v182 = vrot.slane %v163, 4
  %v183 = vadd.f32 %v163, %v182
  %v184 = vrot.slane %v183, 2
  %v185 = vadd.f32 %v183, %v184
  %v186 = vrot.slane %v185, 1
  %v187 = vadd.f32 %v185, %v186
  %v188 = vadd.f32 %v169, 0.0
  %v189 = vadd.f32 %v175, 0.0
  %v190 = vadd.f32 %v181, 0.0
  %v191 = vadd.f32 %v187, 0.0
  %193 = vset.pattern.permute.xlu0 0
  %194 = vperm.xlu0 %193, %v94
  %v195 = vpop.permute.xlu0 %194
  %v197 = vmul.f32 %v195, %v111
  %v198 = vmul.f32 %v195, %v112
  %v199 = vmul.f32 %v195, %v113
  %v200 = vmul.f32 %v195, %v114
  %201 = vset.pattern.permute.xlu0 1
  %202 = vperm.xlu0 %201, %v94
  %v203 = vpop.permute.xlu0 %202
  %v205 = vmul.f32 %v203, %v132
  %v206 = vmul.f32 %v203, %v133
  %v207 = vmul.f32 %v203, %v134
  %v208 = vmul.f32 %v203, %v135
  %v209 = vadd.f32 %v197, %v205
  %v210 = vadd.f32 %v198, %v206
  %v211 = vadd.f32 %v199, %v207
  %v212 = vadd.f32 %v200, %v208
  %213 = vset.pattern.permute.xlu0 2
  %214 = vperm.xlu0 %213, %v94
  %v215 = vpop.permute.xlu0 %214
  %v217 = vadd.f32 %v209, %v215
  %v218 = vadd.f32 %v210, %v215
  %v219 = vadd.f32 %v211, %v215
  %v220 = vadd.f32 %v212, %v215
  %v221 = vtanh.pop %v217
  %v222 = vtanh.pop %v218
  %v223 = vtanh.pop %v219
  %v224 = vtanh.pop %v220
  %225 = vset.pattern.permute.xlu0 3
  %226 = vperm.xlu0 %225, %v94
  %v227 = vpop.permute.xlu0 %226
  %v229 = vmul.f32 %v221, %v227
  %v230 = vmul.f32 %v222, %v227
  %v231 = vmul.f32 %v223, %v227
  %v232 = vmul.f32 %v224, %v227
  %v233 = vrot.slane %v229, 4
  %v234 = vadd.f32 %v229, %v233
  %v235 = vrot.slane %v234, 2
  %v236 = vadd.f32 %v234, %v235
  %v237 = vrot.slane %v236, 1
  %v238 = vadd.f32 %v236, %v237
  %v239 = vrot.slane %v230, 4
  %v240 = vadd.f32 %v230, %v239
  %v241 = vrot.slane %v240, 2
  %v242 = vadd.f32 %v240, %v241
  %v243 = vrot.slane %v242, 1
  %v244 = vadd.f32 %v242, %v243
  %v245 = vrot.slane %v231, 4
  %v246 = vadd.f32 %v231, %v245
  %v247 = vrot.slane %v246, 2
  %v248 = vadd.f32 %v246, %v247
  %v249 = vrot.slane %v248, 1
  %v250 = vadd.f32 %v248, %v249
  %v251 = vrot.slane %v232, 4
  %v252 = vadd.f32 %v232, %v251
  %v253 = vrot.slane %v252, 2
  %v254 = vadd.f32 %v252, %v253
  %v255 = vrot.slane %v254, 1
  %v256 = vadd.f32 %v254, %v255
  %v257 = vadd.f32 %v188, %v238
  %v258 = vadd.f32 %v189, %v244
  %v259 = vadd.f32 %v190, %v250
  %v260 = vadd.f32 %v191, %v256
  %262 = vset.pattern.permute.xlu0 0
  %263 = vperm.xlu0 %262, %v95
  %v264 = vpop.permute.xlu0 %263
  %v266 = vmul.f32 %v264, %v111
  %v267 = vmul.f32 %v264, %v112
  %v268 = vmul.f32 %v264, %v113
  %v269 = vmul.f32 %v264, %v114
  %270 = vset.pattern.permute.xlu0 1
  %271 = vperm.xlu0 %270, %v95
  %v272 = vpop.permute.xlu0 %271
  %v274 = vmul.f32 %v272, %v132
  %v275 = vmul.f32 %v272, %v133
  %v276 = vmul.f32 %v272, %v134
  %v277 = vmul.f32 %v272, %v135
  %v278 = vadd.f32 %v266, %v274
  %v279 = vadd.f32 %v267, %v275
  %v280 = vadd.f32 %v268, %v276
  %v281 = vadd.f32 %v269, %v277
  %282 = vset.pattern.permute.xlu0 2
  %283 = vperm.xlu0 %282, %v95
  %v284 = vpop.permute.xlu0 %283
  %v286 = vadd.f32 %v278, %v284
  %v287 = vadd.f32 %v279, %v284
  %v288 = vadd.f32 %v280, %v284
  %v289 = vadd.f32 %v281, %v284
  %v290 = vtanh.pop %v286
  %v291 = vtanh.pop %v287
  %v292 = vtanh.pop %v288
  %v293 = vtanh.pop %v289
  %294 = vset.pattern.permute.xlu0 3
  %295 = vperm.xlu0 %294, %v95
  %v296 = vpop.permute.xlu0 %295
  %v298 = vmul.f32 %v290, %v296
  %v299 = vmul.f32 %v291, %v296
  %v300 = vmul.f32 %v292, %v296
  %v301 = vmul.f32 %v293, %v296
  %v302 = vrot.slane %v298, 4
  %v303 = vadd.f32 %v298, %v302
  %v304 = vrot.slane %v303, 2
  %v305 = vadd.f32 %v303, %v304
  %v306 = vrot.slane %v305, 1
  %v307 = vadd.f32 %v305, %v306
  %v308 = vrot.slane %v299, 4
  %v309 = vadd.f32 %v299, %v308
  %v310 = vrot.slane %v309, 2
  %v311 = vadd.f32 %v309, %v310
  %v312 = vrot.slane %v311, 1
  %v313 = vadd.f32 %v311, %v312
  %v314 = vrot.slane %v300, 4
  %v315 = vadd.f32 %v300, %v314
  %v316 = vrot.slane %v315, 2
  %v317 = vadd.f32 %v315, %v316
  %v318 = vrot.slane %v317, 1
  %v319 = vadd.f32 %v317, %v318
  %v320 = vrot.slane %v301, 4
  %v321 = vadd.f32 %v301, %v320
  %v322 = vrot.slane %v321, 2
  %v323 = vadd.f32 %v321, %v322
  %v324 = vrot.slane %v323, 1
  %v325 = vadd.f32 %v323, %v324
  %v326 = vadd.f32 %v257, %v307
  %v327 = vadd.f32 %v258, %v313
  %v328 = vadd.f32 %v259, %v319
  %v329 = vadd.f32 %v260, %v325
  %331 = vset.pattern.permute.xlu0 0
  %332 = vperm.xlu0 %331, %v96
  %v333 = vpop.permute.xlu0 %332
  %v335 = vmul.f32 %v333, %v111
  %v336 = vmul.f32 %v333, %v112
  %v337 = vmul.f32 %v333, %v113
  %v338 = vmul.f32 %v333, %v114
  %339 = vset.pattern.permute.xlu0 1
  %340 = vperm.xlu0 %339, %v96
  %v341 = vpop.permute.xlu0 %340
  %v343 = vmul.f32 %v341, %v132
  %v344 = vmul.f32 %v341, %v133
  %v345 = vmul.f32 %v341, %v134
  %v346 = vmul.f32 %v341, %v135
  %v347 = vadd.f32 %v335, %v343
  %v348 = vadd.f32 %v336, %v344
  %v349 = vadd.f32 %v337, %v345
  %v350 = vadd.f32 %v338, %v346
  %351 = vset.pattern.permute.xlu0 2
  %352 = vperm.xlu0 %351, %v96
  %v353 = vpop.permute.xlu0 %352
  %v355 = vadd.f32 %v347, %v353
  %v356 = vadd.f32 %v348, %v353
  %v357 = vadd.f32 %v349, %v353
  %v358 = vadd.f32 %v350, %v353
  %v359 = vtanh.pop %v355
  %v360 = vtanh.pop %v356
  %v361 = vtanh.pop %v357
  %v362 = vtanh.pop %v358
  %363 = vset.pattern.permute.xlu0 3
  %364 = vperm.xlu0 %363, %v96
  %v365 = vpop.permute.xlu0 %364
  %v367 = vmul.f32 %v359, %v365
  %v368 = vmul.f32 %v360, %v365
  %v369 = vmul.f32 %v361, %v365
  %v370 = vmul.f32 %v362, %v365
  %v371 = vrot.slane %v367, 4
  %v372 = vadd.f32 %v367, %v371
  %v373 = vrot.slane %v372, 2
  %v374 = vadd.f32 %v372, %v373
  %v375 = vrot.slane %v374, 1
  %v376 = vadd.f32 %v374, %v375
  %v377 = vrot.slane %v368, 4
  %v378 = vadd.f32 %v368, %v377
  %v379 = vrot.slane %v378, 2
  %v380 = vadd.f32 %v378, %v379
  %v381 = vrot.slane %v380, 1
  %v382 = vadd.f32 %v380, %v381
  %v383 = vrot.slane %v369, 4
  %v384 = vadd.f32 %v369, %v383
  %v385 = vrot.slane %v384, 2
  %v386 = vadd.f32 %v384, %v385
  %v387 = vrot.slane %v386, 1
  %v388 = vadd.f32 %v386, %v387
  %v389 = vrot.slane %v370, 4
  %v390 = vadd.f32 %v370, %v389
  %v391 = vrot.slane %v390, 2
  %v392 = vadd.f32 %v390, %v391
  %v393 = vrot.slane %v392, 1
  %v394 = vadd.f32 %v392, %v393
  %v395 = vadd.f32 %v326, %v376
  %v396 = vadd.f32 %v327, %v382
  %v397 = vadd.f32 %v328, %v388
  %v398 = vadd.f32 %v329, %v394
  %399 = vset.pattern.permute.xlu0 4
  %400 = vperm.xlu0 %399, %v93
  %v401 = vpop.permute.xlu0 %400
  %v403 = vadd.f32 %v395, %v401
  %v404 = vadd.f32 %v396, %v401
  %v405 = vadd.f32 %v397, %v401
  %v406 = vadd.f32 %v398, %v401
  %v407 = vxor.u32 %v403, 2147483648
  %v408 = vxor.u32 %v404, 2147483648
  %v409 = vxor.u32 %v405, 2147483648
  %v410 = vxor.u32 %v406, 2147483648
  %v411 = vmul.f32 %v407, 1.442695
  %v412 = vpow.pop %v411
  %v413 = vmul.f32 %v408, 1.442695
  %v414 = vpow.pop %v413
  %v415 = vmul.f32 %v409, 1.442695
  %v416 = vpow.pop %v415
  %v417 = vmul.f32 %v410, 1.442695
  %v418 = vpow.pop %v417
  %v419 = vadd.f32 %v412, 1.0
  %v420 = vadd.f32 %v414, 1.0
  %v421 = vadd.f32 %v416, 1.0
  %v422 = vadd.f32 %v418, 1.0
  %v423 = vrcp.pop %v419
  %v424 = vmul.f32 %v419, %v423
  %v425 = vsub.f32 1.0, %v424
  %v426 = vmul.f32 %v423, %v425
  %v427 = vadd.f32 %v423, %v426
  %vm428 = vweird.f32 %v419
  %vm429 = vweird.f32 %v423
  %vm430 = vmor %vm428, %vm429
  %v431 = vsel %vm430, %v423, %v427
  %v432 = vand.u32 2147483647, %v419
  %vm433 = vcmp.eq.f32.partialorder %v432, 8.507059e+37
  %v434 = vand.u32 %v419, 2147483648
  %v435 = vor.u32 1.1754944e-38, %v434
  %v436 = vsel %vm433, %v435, %v431
  %v437 = vmul.f32 1.0, %v436
  %v438 = vrcp.pop %v420
  %v439 = vmul.f32 %v420, %v438
  %v440 = vsub.f32 1.0, %v439
  %v441 = vmul.f32 %v438, %v440
  %v442 = vadd.f32 %v438, %v441
  %vm443 = vweird.f32 %v420
  %vm444 = vweird.f32 %v438
  %vm445 = vmor %vm443, %vm444
  %v446 = vsel %vm445, %v438, %v442
  %v447 = vand.u32 2147483647, %v420
  %vm448 = vcmp.eq.f32.partialorder %v447, 8.507059e+37
  %v449 = vand.u32 %v420, 2147483648
  %v450 = vor.u32 1.1754944e-38, %v449
  %v451 = vsel %vm448, %v450, %v446
  %v452 = vmul.f32 1.0, %v451
  %v453 = vrcp.pop %v421
  %v454 = vmul.f32 %v421, %v453
  %v455 = vsub.f32 1.0, %v454
  %v456 = vmul.f32 %v453, %v455
  %v457 = vadd.f32 %v453, %v456
  %vm458 = vweird.f32 %v421
  %vm459 = vweird.f32 %v453
  %vm460 = vmor %vm458, %vm459
  %v461 = vsel %vm460, %v453, %v457
  %v462 = vand.u32 2147483647, %v421
  %vm463 = vcmp.eq.f32.partialorder %v462, 8.507059e+37
  %v464 = vand.u32 %v421, 2147483648
  %v465 = vor.u32 1.1754944e-38, %v464
  %v466 = vsel %vm463, %v465, %v461
  %v467 = vmul.f32 1.0, %v466
  %v468 = vrcp.pop %v422
  %v469 = vmul.f32 %v422, %v468
  %v470 = vsub.f32 1.0, %v469
  %v471 = vmul.f32 %v468, %v470
  %v472 = vadd.f32 %v468, %v471
  %vm473 = vweird.f32 %v422
  %vm474 = vweird.f32 %v468
  %vm475 = vmor %vm473, %vm474
  %v476 = vsel %vm475, %v468, %v472
  %v477 = vand.u32 2147483647, %v422
  %vm478 = vcmp.eq.f32.partialorder %v477, 8.507059e+37
  %v479 = vand.u32 %v422, 2147483648
  %v480 = vor.u32 1.1754944e-38, %v479
  %v481 = vsel %vm478, %v480, %v476
  %v482 = vmul.f32 1.0, %v481
  %v487 = vrot.slane %v452, 7
  %v488 = vrot.slane %v467, 6
  %v489 = vrot.slane %v482, 5
  %vm490 = vcmask 1040384
  %v491 = vsel %vm490, %v437, %v487
  %vm492 = vcmask 1042434
  %v493 = vsel %vm492, %v488, %v489
  %vm494 = vcmask 1041408
  %v495 = vsel %vm494, %v491, %v493
  %v497 = vlaneseq
  %vm498 = vcmp.ge.s32.totalorder %v497, 0
  %vm499 = vcmp.lt.s32.totalorder %v497, 512
  %vm500 = vmand %vm498, %vm499
  %501 = vst.msk [vmem:[%s2] sm:$0xf] %vm500, %v495
  // Predicated region
  $region10: #{polarnet_forward.1} parent=0 // pred_check
    _
  $region11: #{polarnet_forward.1} parent=0 // pred_check_branch
    %503 = sbr.rel (0) target = $region13
  $region12: #{polarnet_forward.1} parent=0 // pred_region
    _
  $region13: #{polarnet_forward.1} parent=0 // pred_fallthru
    _
  // Predicated region
  $region14: #{polarnet_forward.1} parent=0 // pred_check
    _
  $region15: #{polarnet_forward.1} parent=0 // pred_check_branch
    %505 = sbr.rel (0) target = $region17
  $region16: #{polarnet_forward.1} parent=0 // pred_region
    _
  $region17: #{polarnet_forward.1} parent=0 // pred_fallthru
    _

</llo_original>
